<compile_context>
chip_gen: v7x
topology: tpu7x:2x2x1
jax: 0.10.0
libtpu: 0.0.40
codegen_flags: <defaults>
</compile_context>

<pallas_src>
import jax
import jax.numpy as jnp
from jax.experimental import pallas as pl
from jax.experimental.pallas import tpu as pltpu


# ------------------------------ kernels -------------------------------------


def _kernel_single(x_ref, w_ref, b_ref, o_ref):
    # Single MXU pass: x is the pre-concatenated (TM, 2F) activation.
    acc = jnp.dot(x_ref[...], w_ref[...], preferred_element_type=jnp.float32)
    o_ref[...] = (acc + b_ref[...].astype(jnp.float32)).astype(o_ref.dtype)


def _kernel_dual(f1_ref, f2_ref, w1_ref, w2_ref, b_ref, o_ref):
    acc = jnp.dot(f1_ref[...], w1_ref[...], preferred_element_type=jnp.float32)
    acc = acc + jnp.dot(f2_ref[...], w2_ref[...],
                        preferred_element_type=jnp.float32)
    o_ref[...] = (acc + b_ref[...].astype(jnp.float32)).astype(o_ref.dtype)


def _kernel_dual_ktiled(f1_ref, f2_ref, w1_ref, w2_ref, b_ref, o_ref, acc_ref):
    k = pl.program_id(2)

    @pl.when(k == 0)
    def _():
        acc_ref[...] = jnp.zeros_like(acc_ref)

    acc_ref[...] += jnp.dot(f1_ref[...], w1_ref[...],
                            preferred_element_type=jnp.float32)
    acc_ref[...] += jnp.dot(f2_ref[...], w2_ref[...],
                            preferred_element_type=jnp.float32)

    @pl.when(k == pl.num_programs(2) - 1)
    def _():
        o_ref[...] = (acc_ref[...] + b_ref[...].astype(jnp.float32)
                      ).astype(o_ref.dtype)


# ------------------------------ helpers --------------------------------------


def _cdiv(a, b):
    return -(-a // b)


def _round_up(x, m):
    return _cdiv(x, m) * m


def _vmem_capacity_bytes():
    """Physical VMEM of the current generation; conservative 64 MiB fallback."""
    try:
        info = pltpu.get_tpu_info()
        for name in ("vmem_capacity_bytes", "vmem_size_bytes", "vmem_bytes"):
            v = getattr(info, name, None)
            if v:
                return int(v)
    except Exception:
        pass
    return 64 << 20  # v7x per-TensorCore size: safe lower bound everywhere.


def _vmem_limit(footprint, cap):
    """Never below the footprint; leave a few MiB for Mosaic internals."""
    return int(min(cap, max(footprint + (4 << 20), 32 << 20)))


def fold_weight(weight_t, dtype=None):
    """Fold a (3F, O) pre-transposed Linear weight into two (F, O) weights.

    Optionally cast the folded weights (e.g. jnp.bfloat16 for the mem-bound
    production path); the kernel always accumulates in f32.
    """
    three_f = weight_t.shape[0]
    assert three_f % 3 == 0
    F = three_f // 3
    w1, w2, w3 = weight_t[:F], weight_t[F:2 * F], weight_t[2 * F:]
    w1f, w2f = w1 + w3, w2 + w3
    if dtype is not None:
        w1f, w2f = w1f.astype(dtype), w2f.astype(dtype)
    return w1f, w2f


def init_params(key, feat_size, output_size):
    """nn.Linear-style init: uniform +-1/sqrt(fan_in). Returns (3F,O) W^T, (1,O) b."""
    in_features = feat_size * 3
    k_w, k_b = jax.random.split(key)
    bound = 1.0 / jnp.sqrt(jnp.float32(in_features))
    weight_t = jax.random.uniform(
        k_w, (in_features, output_size), jnp.float32, -bound, bound)
    bias = jax.random.uniform(
        k_b, (1, output_size), jnp.float32, -bound, bound)
    return weight_t, bias


# ------------------------------ forward --------------------------------------


def addnn_forward(feat_1, feat_2, w1_folded, w2_folded, bias, *,
                  force_path=None):
    """feat_1, feat_2: (B, F); w*_folded: (F, O); bias: (1, O) -> (B, O) f32."""
    B, F = feat_1.shape
    Fw, O = w1_folded.shape
    assert Fw == F and w2_folded.shape == (F, O) and bias.shape == (1, O)

    # Features follow the weight dtype (bf16 production path halves DMA bytes).
    if feat_1.dtype != w1_folded.dtype:
        feat_1 = feat_1.astype(w1_folded.dtype)
        feat_2 = feat_2.astype(w1_folded.dtype)

    x_item = jnp.dtype(feat_1.dtype).itemsize
    w_item = jnp.dtype(w1_folded.dtype).itemsize
    out_dtype = jnp.float32

    cap = _vmem_capacity_bytes()
    budget = int(cap * 0.80)             # pipeline / compiler headroom
    big_vmem = cap >= (96 << 20)         # v5e / v6e (128 MiB) vs v7x (64 MiB)
    max_tm = 1024 if big_vmem else 512
    max_tn = 1024 if big_vmem else 512

    # Batch tile: sublane axis, multiple of 8; edge blocks masked via cdiv grid.
    TM = min(max_tm, _round_up(B, 8))

    def _resident_bytes(tm):
        # x2 everywhere: Pallas double-buffers pipelined blocks.
        return (2 * (2 * F * O * w_item)        # both folded weights
                + 2 * (2 * tm * F * x_item)     # two feature tiles
                + 2 * (tm * O * 4)              # f32 output tile
                + 2 * (O * 4))                  # bias

    resident = _resident_bytes(TM) <= budget
    if force_path is not None:
        assert force_path in ("resident", "tiled", "ktiled")
        if force_path == "resident":
            assert resident, "forced resident path does not fit VMEM"
        else:
            resident = False

    # ---------------- Path 1: weights resident in VMEM ----------------------
    if resident:
        # Keep both v7x TensorCores busy: >=2 batch blocks whenever B >= 16.
        if B >= 16:
            TM = min(TM, _round_up(_cdiv(B, 2), 8))
        Gi = _cdiv(B, TM)
        footprint = _resident_bytes(TM)
        params = pltpu.CompilerParams(
            dimension_semantics=("parallel",),
            vmem_limit_bytes=_vmem_limit(footprint, cap),
        )

        if F < 128 and force_path is None:
            # Small K under-fills the MXU twice; use one pass with a (2F, O)
            # weight and a one-time wrapper concat of the activations.
            x_cat = jnp.concatenate([feat_1, feat_2], axis=-1)        # (B, 2F)
            w_cat = jnp.concatenate([w1_folded, w2_folded], axis=0)   # (2F, O)
            return pl.pallas_call(
                _kernel_single,
                out_shape=jax.ShapeDtypeStruct((B, O), out_dtype),
                grid=(Gi,),
                in_specs=[
                    pl.BlockSpec((TM, 2 * F), lambda i: (i, 0)),
                    pl.BlockSpec((2 * F, O), lambda i: (0, 0)),  # fetched once
                    pl.BlockSpec((1, O), lambda i: (0, 0)),      # fetched once
                ],
                out_specs=pl.BlockSpec((TM, O), lambda i: (i, 0)),
                compiler_params=params,
            )(x_cat, w_cat, bias)

        return pl.pallas_call(
            _kernel_dual,
            out_shape=jax.ShapeDtypeStruct((B, O), out_dtype),
            grid=(Gi,),
            in_specs=[
                pl.BlockSpec((TM, F), lambda i: (i, 0)),
                pl.BlockSpec((TM, F), lambda i: (i, 0)),
                pl.BlockSpec((F, O), lambda i: (0, 0)),   # fetched once
                pl.BlockSpec((F, O), lambda i: (0, 0)),   # fetched once
                pl.BlockSpec((1, O), lambda i: (0, 0)),
            ],
            out_specs=pl.BlockSpec((TM, O), lambda i: (i, 0)),
            compiler_params=params,
        )(feat_1, feat_2, w1_folded, w2_folded, bias)

    # ------------- Paths 2/3: tiled over (batch, output) [+ K] --------------
    def _strip_bytes(tn, tk):
        return (2 * (2 * tk * tn * w_item)      # two weight tiles
                + 2 * (2 * TM * tk * x_item)    # two feature tiles
                + 2 * (TM * tn * 4)             # f32 output tile
                + TM * tn * 4                   # f32 accumulator (ktiled)
                + 2 * (tn * 4))                 # bias tile

    # Output tile: lane axis, multiple of 128 (or full O when O <= 128).
    if O <= 128:
        TN = O
    else:
        TN = 128
        t = min(max_tn, (O // 128) * 128)
        while t >= 128:
            if _strip_bytes(t, F) <= budget:
                TN = t
                break
            t -= 128

    need_ktile = (_strip_bytes(TN, F) > budget) or (force_path == "ktiled")
    TK = F
    if need_ktile:
        TK = None
        if F % 128 == 0:
            cands = list(range(128, min(F, 2048) + 1, 128))
            # Production: largest fitting K tile. Forced (test): smallest, so
            # the multi-step accumulation actually gets exercised.
            cands = sorted(cands, reverse=(force_path != "ktiled"))
            for cand in cands:
                if F % cand == 0 and _strip_bytes(TN, cand) <= budget:
                    TK = cand
                    break
        if TK is None:
            # TODO(synk): F too large / not 128-divisible for clean K-tiling;
            # fall back to a full-F strip and let Mosaic manage VMEM pressure.
            TK = F
            need_ktile = False

    Gi = _cdiv(B, TM)
    Gj = _cdiv(O, TN)
    Gk = _cdiv(F, TK)

    # Grid order by HBM traffic: the operand indexed by the INNER axis is
    # re-read once per outer tile -> make the smaller one the re-read one.
    batch_outer = (Gi * O) <= (Gj * B)
    footprint = _strip_bytes(TN, TK)
    params = pltpu.CompilerParams(
        dimension_semantics=(("parallel", "parallel", "arbitrary")
                             if need_ktile else ("parallel", "parallel")),
        vmem_limit_bytes=_vmem_limit(footprint, cap),
    )

    if need_ktile:
        if batch_outer:
            grid = (Gi, Gj, Gk)
            f_map = lambda i, j, k: (i, k)
            w_map = lambda i, j, k: (k, j)
            b_map = lambda i, j, k: (0, j)
            o_map = lambda i, j, k: (i, j)
        else:
            grid = (Gj, Gi, Gk)
            f_map = lambda j, i, k: (i, k)
            w_map = lambda j, i, k: (k, j)
            b_map = lambda j, i, k: (0, j)
            o_map = lambda j, i, k: (i, j)
        return pl.pallas_call(
            _kernel_dual_ktiled,
            out_shape=jax.ShapeDtypeStruct((B, O), out_dtype),
            grid=grid,
            in_specs=[
                pl.BlockSpec((TM, TK), f_map),
                pl.BlockSpec((TM, TK), f_map),
                pl.BlockSpec((TK, TN), w_map),
                pl.BlockSpec((TK, TN), w_map),
                pl.BlockSpec((1, TN), b_map),
            ],
            out_specs=pl.BlockSpec((TM, TN), o_map),
            scratch_shapes=[pltpu.VMEM((TM, TN), jnp.float32)],
            compiler_params=params,
        )(feat_1, feat_2, w1_folded, w2_folded, bias)

    if batch_outer:
        grid = (Gi, Gj)
        f_map = lambda i, j: (i, 0)
        w_map = lambda i, j: (0, j)
        b_map = lambda i, j: (0, j)
        o_map = lambda i, j: (i, j)
    else:
        grid = (Gj, Gi)
        f_map = lambda j, i: (i, 0)
        w_map = lambda j, i: (0, j)
        b_map = lambda j, i: (0, j)
        o_map = lambda j, i: (i, j)
    return pl.pallas_call(
        _kernel_dual,
        out_shape=jax.ShapeDtypeStruct((B, O), out_dtype),
        grid=grid,
        in_specs=[
            pl.BlockSpec((TM, F), f_map),
            pl.BlockSpec((TM, F), f_map),
            pl.BlockSpec((F, TN), w_map),
            pl.BlockSpec((F, TN), w_map),
            pl.BlockSpec((1, TN), b_map),
        ],
        out_specs=pl.BlockSpec((TM, TN), o_map),
        compiler_params=params,
    )(feat_1, feat_2, w1_folded, w2_folded, bias)


# ------------------------------- demo ----------------------------------------


if __name__ == "__main__":
    key = jax.random.PRNGKey(0)
    k1, k2, kp = jax.random.split(key, 3)

    # --- smoke test at the module's natural small shapes (correctness only) --
    batch, feat_size, output_size = 8, 32, 64
    feat_1 = jax.random.normal(k1, (batch, feat_size), jnp.float32)
    feat_2 = jax.random.normal(k2, (batch, feat_size), jnp.float32)
    weight_t, bias = init_params(kp, feat_size, output_size)
    w1f, w2f = fold_weight(weight_t)

    out = addnn_forward(feat_1, feat_2, w1f, w2f, bias)
    jax.block_until_ready(out)
    ref = (jnp.concatenate([feat_1, feat_2, feat_1 + feat_2], axis=-1)
           @ weight_t + bias)
    assert out.shape == (batch, output_size)
    assert jnp.allclose(out, ref, atol=1e-5, rtol=1e-5)

    # --- exercise the tiled / K-tiled paths and the bf16 operand option ------
    B2, F2, O2 = 64, 256, 384
    ka, kb, kw = jax.random.split(jax.random.PRNGKey(1), 3)
    g1 = jax.random.normal(ka, (B2, F2), jnp.float32)
    g2 = jax.random.normal(kb, (B2, F2), jnp.float32)
    wt2, b2 = init_params(kw, F2, O2)
    w1f2, w2f2 = fold_weight(wt2)
    ref2 = jnp.concatenate([g1, g2, g1 + g2], axis=-1) @ wt2 + b2

    for path in ("resident", "tiled", "ktiled"):
        o = addnn_forward(g1, g2, w1f2, w2f2, b2, force_path=path)
        jax.block_until_ready(o)
        assert jnp.allclose(o, ref2, atol=5e-4, rtol=1e-4), path

    # bf16 operands (production, mem-bound): f32 accumulation, loose tolerance.
    w1b, w2b = fold_weight(wt2, dtype=jnp.bfloat16)
    ob = addnn_forward(g1, g2, w1b, w2b, b2)
    jax.block_until_ready(ob)
    assert jnp.allclose(ob, ref2, atol=2e-1, rtol=5e-2)

    print("KERNEL_OK")
</pallas_src>

<mosaic_0001>
module attributes {stable_mosaic.version = 11 : i64} {
  func.func @_kernel_single(%arg0: i32, %arg1: memref<8x64xf32, #tpu.memory_space<vmem>>, %arg2: memref<64x64xf32, #tpu.memory_space<vmem>>, %arg3: memref<1x64xf32, #tpu.memory_space<vmem>>, %arg4: memref<8x64xf32, #tpu.memory_space<vmem>>) attributes {dimension_semantics = [#tpu.dimension_semantics<parallel>], iteration_bounds = array<i64: 1>, scalar_prefetch = 0 : i64, scratch_operands = 0 : i64, tpu.core_type = #tpu.core_type<tc>, window_params = [{transform_indices = @transform_0, window_bounds = array<i64: 8, 64>}, {pipeline_mode = #tpu.pipeline_mode<synchronous>, transform_indices = @transform_1, window_bounds = array<i64: 64, 64>}, {pipeline_mode = #tpu.pipeline_mode<synchronous>, transform_indices = @transform_2, window_bounds = array<i64: 1, 64>}, {transform_indices = @transform_3, window_bounds = array<i64: 8, 64>}]} {
    %c0 = arith.constant 0 : index
    %c0_0 = arith.constant 0 : index
    %0 = vector.load %arg1[%c0, %c0_0] : memref<8x64xf32, #tpu.memory_space<vmem>>, vector<8x64xf32>
    %c0_1 = arith.constant 0 : index
    %c0_2 = arith.constant 0 : index
    %1 = vector.load %arg2[%c0_1, %c0_2] : memref<64x64xf32, #tpu.memory_space<vmem>>, vector<64x64xf32>
    %cst = arith.constant dense<0.000000e+00> : vector<8x64xf32>
    %2 = tpu.matmul %0, %1, %cst {dimension_numbers = #tpu.dot_dimension_numbers<[1], [0], [0], [1], [0, 0, 1, 1], [], []>} : vector<8x64xf32>, vector<64x64xf32>, vector<8x64xf32> -> vector<8x64xf32>
    %c0_3 = arith.constant 0 : index
    %c0_4 = arith.constant 0 : index
    %3 = vector.load %arg3[%c0_3, %c0_4] : memref<1x64xf32, #tpu.memory_space<vmem>>, vector<1x64xf32>
    %4 = vector.broadcast %3 : vector<1x64xf32> to vector<8x64xf32>
    %5 = arith.addf %2, %4 : vector<8x64xf32>
    %c0_5 = arith.constant 0 : index
    %c0_6 = arith.constant 0 : index
    %6 = vector.load %arg4[%c0_5, %c0_6] : memref<8x64xf32, #tpu.memory_space<vmem>>, vector<8x64xf32>
    tpu.vector_store %arg4[%c0_5, %c0_6], %5 {strides = array<i32>} : memref<8x64xf32, #tpu.memory_space<vmem>>, vector<8x64xf32>,
    return
  }
  func.func @transform_0(%arg0: i32) -> (i32, i32) {
    %c0_i32 = arith.constant 0 : i32
    %c0_i32_0 = arith.constant 0 : i32
    return %arg0, %c0_i32 : i32, i32
  }
  func.func @transform_1(%arg0: i32) -> (i32, i32) {
    %c0_i32 = arith.constant 0 : i32
    %c0_i32_0 = arith.constant 0 : i32
    %c0_i32_1 = arith.constant 0 : i32
    return %c0_i32, %c0_i32_0 : i32, i32
  }
  func.func @transform_2(%arg0: i32) -> (i32, i32) {
    %c0_i32 = arith.constant 0 : i32
    %c0_i32_0 = arith.constant 0 : i32
    %c0_i32_1 = arith.constant 0 : i32
    return %c0_i32, %c0_i32_0 : i32, i32
  }
  func.func @transform_3(%arg0: i32) -> (i32, i32) {
    %c0_i32 = arith.constant 0 : i32
    %c0_i32_0 = arith.constant 0 : i32
    return %arg0, %c0_i32 : i32, i32
  }
}

</mosaic_0001>

<llo_original>
// kernel: tpu_custom_call.1
$region0: #{tpu_custom_call.1}
  #allocation0 [shape = 'u32[]', space=smem, size = 0x4, offset = 0x4, fixed_abs, tag = 'smem constant byte address 0x4 - core index']
  #allocation1 [shape = 'u32[144,128]{1,0:T(1,128)}', space=vmem, size = 0x12000, scoped, tag = 'internal scratch']
  %s0 = inlined_call_operand.hbm [shape: f32[8,64], index: 0, kind: input, shape index: {}]
  %s1 = inlined_call_operand.hbm [shape: f32[64,64], index: 1, kind: input, shape index: {}]
  %s2 = inlined_call_operand.vmem [shape: f32[1,64], index: 2, kind: input, shape index: {}]
  %s3 = inlined_call_operand.hbm [shape: f32[8,64], index: 3, kind: output, shape index: {}]
  %s4 = sld [smem:[#allocation0]]
  $region30: #{tpu_custom_call.1} parent=0
    _
  %s6 = ssub.s32 1, %s4
  %s7 = scalar_select 0, %s6, %s4
  $region1: #{tpu_custom_call.1} parent=0
    #allocation2 [shape = 'u8[4096]{0}', space=vmem, size = 0x1000, scoped, tag = 'input window, operand 0, single buffered']
    #allocation3 [shape = 's32[1]{0}', space=sflag, size = 0x4, scoped, tag = 'scoped memory for tpu_custom_call.1']
    #allocation4 [shape = 's32[1]{0}', space=sflag, size = 0x4, scoped, tag = 'scoped memory for tpu_custom_call.1']
    #allocation5 [shape = 'u8[32768]{0}', space=vmem, size = 0x8000, scoped, tag = 'input window, operand 1, single buffered']
    #allocation6 [shape = 's32[1]{0}', space=sflag, size = 0x4, scoped, tag = 'scoped memory for tpu_custom_call.1']
    #allocation7 [shape = 'u8[4096]{0}', space=vmem, size = 0x1000, scoped, tag = 'output window, operand 0, single buffered']
    %8 = vsyncpa [#allocation3], 0
    %9 = vsyncpa [#allocation6], 0
    %10 = vsyncpa [#allocation4], 0
    // Predicated region
    $region2: #{tpu_custom_call.1} parent=1 // pred_check
      _
    $region3: #{tpu_custom_call.1} parent=1 // pred_check_branch
      %12 = sbr.rel (0) target = $region5
    $region4: #{tpu_custom_call.1} parent=1 // pred_region
      %s14 = ssub.s32 128, 128
      %15 = vsyncadd [#allocation3], %s14
      %s17 = sshll.u32 [#allocation2], 4
      %s18 = int_to_ptr.vmem [resolvable:$true] %s17
      %20 = dma.hbm_to_vmem [thread:$0]  %s0, 128, %s18, [#allocation3]
    $region5: #{tpu_custom_call.1} parent=1 // pred_fallthru
      _
    // Predicated region
    $region6: #{tpu_custom_call.1} parent=1 // pred_check
      _
    $region7: #{tpu_custom_call.1} parent=1 // pred_check_branch
      %22 = sbr.rel (0) target = $region9
    $region8: #{tpu_custom_call.1} parent=1 // pred_region
      %s24 = ssub.s32 1024, 1024
      %25 = vsyncadd [#allocation6], %s24
      %s26 = sshll.u32 [#allocation5], 4
      %s27 = int_to_ptr.vmem [resolvable:$true] %s26
      %32 = dma.hbm_to_vmem [thread:$0]  %s1, 1024, %s27, [#allocation6], 128, 128, 8
    $region9: #{tpu_custom_call.1} parent=1 // pred_fallthru
      _
    // Predicated region
    $region10: #{tpu_custom_call.1} parent=1 // pred_check
      _
    $region11: #{tpu_custom_call.1} parent=1 // pred_check_branch
      %34 = sbr.rel (0) target = $region13
    $region12: #{tpu_custom_call.1} parent=1 // pred_region
      _
    $region13: #{tpu_custom_call.1} parent=1 // pred_fallthru
      _
    // Predicated region
    $region14: #{tpu_custom_call.1} parent=1 // pred_check
      _
    $region15: #{tpu_custom_call.1} parent=1 // pred_check_branch
      %36 = sbr.rel (0) target = $region17
    $region16: #{tpu_custom_call.1} parent=1 // pred_region
      %37 = dma.done [#allocation3], 128
    $region17: #{tpu_custom_call.1} parent=1 // pred_fallthru
      _
    // Predicated region
    $region18: #{tpu_custom_call.1} parent=1 // pred_check
      _
    $region19: #{tpu_custom_call.1} parent=1 // pred_check_branch
      %39 = sbr.rel (0) target = $region21
    $region20: #{tpu_custom_call.1} parent=1 // pred_region
      %40 = dma.done [#allocation6], 1024
    $region21: #{tpu_custom_call.1} parent=1 // pred_fallthru
      _
    %v41 = vld [vmem:[#allocation2] sm:$0xff]
    %v42 = vld [vmem:[#allocation5] sm:$0xff]
    %v43 = vld [vmem:[#allocation5 + $0x8] sm:$0xff]
    %v44 = vld [vmem:[#allocation5 + $0x10] sm:$0xff]
    %v45 = vld [vmem:[#allocation5 + $0x18] sm:$0xff]
    %v46 = vld [vmem:[#allocation5 + $0x20] sm:$0xff]
    %v47 = vld [vmem:[#allocation5 + $0x28] sm:$0xff]
    %v48 = vld [vmem:[#allocation5 + $0x30] sm:$0xff]
    %v49 = vld [vmem:[#allocation5 + $0x38] sm:$0xff]
    %v50 = vld [vmem:[%s2] sm:$0x1]
    %v52 = vlaneseq
    %v53 = vshrl.u32 %v52, 7
    %v54 = vsub.s32 0, %v53
    %v55 = vrot.slane %v50, %v54
    %vm57 = vcmask 523264
    %v59 = vsel %vm57, %v41, 0
    %61 = vmatprep.subr.mxu0 0.0
    %62 = vmatpush1.msra.mxu0 %v42
    %63 = vmatprep.subr.mxu0 0.0
    %64 = vmatpush1.msra.mxu0 %v43
    %65 = vmatprep.subr.mxu0 0.0
    %66 = vmatpush1.msra.mxu0 %v44
    %67 = vmatprep.subr.mxu0 0.0
    %68 = vmatpush1.msra.mxu0 %v45
    %69 = vmatprep.subr.mxu0 0.0
    %70 = vmatpush1.msra.mxu0 %v46
    %71 = vmatprep.subr.mxu0 0.0
    %72 = vmatpush1.msra.mxu0 %v47
    %73 = vmatprep.subr.mxu0 0.0
    %74 = vmatpush1.msra.mxu0 %v48
    %75 = vmatprep.subr.mxu0 0.0
    %76 = vmatpush1.msra.mxu0 %v49
    %77 = vmatprep.subr.mxu0 0.0
    %78 = vmatpush1.msra.mxu0 0.0
    %79 = vmatprep.subr.mxu0 0.0
    %80 = vmatpush1.msra.mxu0 0.0
    %81 = vmatprep.subr.mxu0 0.0
    %82 = vmatpush1.msra.mxu0 0.0
    %83 = vmatprep.subr.mxu0 0.0
    %84 = vmatpush1.msra.mxu0 0.0
    %85 = vmatprep.subr.mxu0 0.0
    %86 = vmatpush1.msra.mxu0 0.0
    %87 = vmatprep.subr.mxu0 0.0
    %88 = vmatpush1.msra.mxu0 0.0
    %89 = vmatprep.subr.mxu0 0.0
    %90 = vmatpush1.msra.mxu0 0.0
    %91 = vmatprep.subr.mxu0 0.0
    %92 = vmatpush1.msra.mxu0 0.0
    %93 = vmatprep.subr.mxu0 0.0
    %94 = vmatpush1.msra.mxu0 0.0
    %95 = vmatprep.subr.mxu0 0.0
    %96 = vmatpush1.msra.mxu0 0.0
    %97 = vmatprep.subr.mxu0 0.0
    %98 = vmatpush1.msra.mxu0 0.0
    %99 = vmatprep.subr.mxu0 0.0
    %100 = vmatpush1.msra.mxu0 0.0
    %101 = vmatprep.subr.mxu0 0.0
    %102 = vmatpush1.msra.mxu0 0.0
    %103 = vmatprep.subr.mxu0 0.0
    %104 = vmatpush1.msra.mxu0 0.0
    %105 = vmatprep.subr.mxu0 0.0
    %106 = vmatpush1.msra.mxu0 0.0
    %107 = vmatprep.subr.mxu0 0.0
    %108 = vmatpush1.msra.mxu0 0.0
    %109 = vmatprep.subr.mxu0 0.0
    %110 = vmatpush1.msra.mxu0 0.0
    %111 = vmatprep.subr.mxu0 0.0
    %112 = vmatpush1.msra.mxu0 0.0
    %113 = vmatprep.subr.mxu0 0.0
    %114 = vmatpush1.msra.mxu0 0.0
    %115 = vmatprep.subr.mxu0 0.0
    %116 = vmatpush1.msra.mxu0 0.0
    %117 = vmatprep.subr.mxu0 0.0
    %118 = vmatpush1.msra.mxu0 0.0
    %119 = vmatprep.subr.mxu0 0.0
    %120 = vmatpush1.msra.mxu0 0.0
    %121 = vmatprep.subr.mxu0 0.0
    %122 = vmatpush1.msra.mxu0 0.0
    %123 = vmatprep.subr.mxu0 0.0
    %124 = vmatpush1.msra.mxu0 0.0
    %125 = vmatprep.mubr.f32.mxu0 0.0
    %126 = vmatmul.mubr.f32.gmra.mrb[0].mxu0 %v59
    %v127 = vpop.f32.mrb[0].mxu0
    %v128 = vadd.f32 %v55, %v127
    %v129 = vpop.f32.mrb[0].mxu0
    %130 = vdwg.mxu0
    %131 = vst.msk [vmem:[#allocation7] sm:$0xff] %vm57, %v128
    // Predicated region
    $region22: #{tpu_custom_call.1} parent=1 // pred_check
      _
    $region23: #{tpu_custom_call.1} parent=1 // pred_check_branch
      %133 = sbr.rel (0) target = $region25
    $region24: #{tpu_custom_call.1} parent=1 // pred_region
      %s135 = ssub.s32 128, 128
      %136 = vsyncadd [#allocation4], %s135
      %s138 = sshll.u32 [#allocation7], 4
      %s139 = int_to_ptr.vmem [resolvable:$true] %s138
      %141 = dma.vmem_to_hbm [thread:$0]  %s139, 128, %s3, [#allocation4]
    $region25: #{tpu_custom_call.1} parent=1 // pred_fallthru
      _
    // Predicated region
    $region26: #{tpu_custom_call.1} parent=1 // pred_check
      _
    $region27: #{tpu_custom_call.1} parent=1 // pred_check_branch
      %143 = sbr.rel (0) target = $region29
    $region28: #{tpu_custom_call.1} parent=1 // pred_region
      %144 = dma.done [#allocation4], 128
    $region29: #{tpu_custom_call.1} parent=1 // pred_fallthru
      _
    %145 = vsyncpa [#allocation3], 1
    %146 = vsyncpa [#allocation6], 1
    %147 = vsyncpa [#allocation4], 1

</llo_original>
